<compile_context>
chip_gen: v6e
topology: v6e:2x2x1
jax: 0.10.0
libtpu: 0.0.40
codegen_flags: <defaults>
</compile_context>

<pallas_src>
import math
import functools

import jax
import jax.numpy as jnp
from jax.experimental import pallas as pl
from jax.experimental.pallas import tpu as pltpu

BN_EPS = 1e-5
_VMEM_LIMIT_BYTES = 32 * 1024 * 1024   # explicit scoped-VMEM budget (safe on v5e/v6e/v7x)
_TM_TARGET = 512                       # target rows per tile (sublane aligned, >=512)


def _round_up(x, m):
    return (x + m - 1) // m * m


def _compiler_params(dim_sems):
    return pltpu.CompilerParams(dimension_semantics=dim_sems,
                                vmem_limit_bytes=_VMEM_LIMIT_BYTES)


# ----------------------------- Pallas kernels -----------------------------

def _mm_bias_act_kernel(x_ref, w_ref, b_ref, o_ref, *, act):
    """o = act(x @ w + b); bf16 operands, f32 accumulation, f32 epilogue."""
    y = jnp.dot(x_ref[...], w_ref[...], preferred_element_type=jnp.float32)
    y = y + b_ref[...]
    if act == "relu":
        y = jnp.maximum(y, 0.0)
    o_ref[...] = y.astype(o_ref.dtype)


def matmul_bias_act(x, w, bias, act="none", out_dtype=jnp.bfloat16):
    """Tiled (M,K)@(K,N) + bias [+ ReLU].  Conv-as-matmul with folded BN."""
    M, K = x.shape
    N = w.shape[1]
    Mp = _round_up(M, 8)
    tm = Mp if Mp <= _TM_TARGET else _TM_TARGET
    Mp = _round_up(Mp, tm)
    if Mp != M:
        x = jnp.pad(x, ((0, Mp - M), (0, 0)))
    out = pl.pallas_call(
        functools.partial(_mm_bias_act_kernel, act=act),
        out_shape=jax.ShapeDtypeStruct((Mp, N), out_dtype),
        grid=(Mp // tm,),
        in_specs=[
            pl.BlockSpec((tm, K), lambda i: (i, 0)),
            pl.BlockSpec((K, N), lambda i: (0, 0)),
            pl.BlockSpec((1, N), lambda i: (0, 0)),
        ],
        out_specs=pl.BlockSpec((tm, N), lambda i: (i, 0)),
        compiler_params=_compiler_params(("parallel",)),
    )(x.astype(jnp.bfloat16), w.astype(jnp.bfloat16),
      bias.reshape(1, N).astype(jnp.float32))
    return out[:M]


def _mm_relu_pool_kernel(x_ref, w_ref, b_ref, y_ref, pool_ref, *,
                         inv_hw, hw_true, thw):
    """3x3-conv matmul + ReLU, with the SE global average pool fused in:
    per-batch channel means are accumulated across the hw-tile grid axis."""
    j = pl.program_id(1)
    y = jnp.dot(x_ref[0], w_ref[...], preferred_element_type=jnp.float32) + b_ref[...]
    y = jnp.maximum(y, 0.0)
    y_ref[0] = y.astype(y_ref.dtype)

    @pl.when(j == 0)
    def _():
        pool_ref[...] = jnp.zeros_like(pool_ref)

    # Mask rows that are only padding so they never pollute the pooled mean.
    row = jax.lax.broadcasted_iota(jnp.int32, y.shape, 0) + j * thw
    yv = jnp.where(row < hw_true, y, 0.0)
    pool_ref[0] = pool_ref[0] + jnp.sum(yv, axis=0, keepdims=True) * inv_hw


def conv_matmul_relu_pool(patches, w, bias):
    """patches: (B, HW, K) -> y (B, HW, N) bf16 and pooled mean (B, 1, N) f32."""
    B, HW, K = patches.shape
    N = w.shape[1]
    HWp = _round_up(HW, 8)
    thw = HWp if HWp <= _TM_TARGET else _TM_TARGET
    HWp = _round_up(HWp, thw)
    if HWp != HW:
        patches = jnp.pad(patches, ((0, 0), (0, HWp - HW), (0, 0)))
    y, pooled = pl.pallas_call(
        functools.partial(_mm_relu_pool_kernel, inv_hw=1.0 / float(HW),
                          hw_true=HW, thw=thw),
        out_shape=(jax.ShapeDtypeStruct((B, HWp, N), jnp.bfloat16),
                   jax.ShapeDtypeStruct((B, 1, N), jnp.float32)),
        grid=(B, HWp // thw),
        in_specs=[
            pl.BlockSpec((1, thw, K), lambda b, j: (b, j, 0)),
            pl.BlockSpec((K, N), lambda b, j: (0, 0)),
            pl.BlockSpec((1, N), lambda b, j: (0, 0)),
        ],
        out_specs=(pl.BlockSpec((1, thw, N), lambda b, j: (b, j, 0)),
                   pl.BlockSpec((1, 1, N), lambda b, j: (b, 0, 0))),
        compiler_params=_compiler_params(("parallel", "arbitrary")),
    )(patches.astype(jnp.bfloat16), w.astype(jnp.bfloat16),
      bias.reshape(1, N).astype(jnp.float32))
    return y[:, :HW], pooled


def _cconv_fused_kernel(*refs, has_se, has_proj):
    """out = relu( (f * se_gate) @ Wc + c_bias + skip_term ), where
    skip_term = skip @ Wproj + proj_bias (projection block) or skip (identity)."""
    idx = 0
    f_ref = refs[idx]; idx += 1
    if has_se:
        pool_ref, w1_ref, b1_ref, w2_ref, b2_ref = refs[idx:idx + 5]; idx += 5
    wc_ref = refs[idx]; idx += 1
    cb_ref = refs[idx]; idx += 1
    skip_ref = refs[idx]; idx += 1
    if has_proj:
        pw_ref = refs[idx]; idx += 1
        pb_ref = refs[idx]; idx += 1
    o_ref = refs[idx]

    if has_se:
        pooled = pool_ref[0]                                            # (1, Wb)
        s = jnp.dot(pooled, w1_ref[...], preferred_element_type=jnp.float32) + b1_ref[...]
        s = jnp.maximum(s, 0.0)
        g = jax.nn.sigmoid(
            jnp.dot(s, w2_ref[...], preferred_element_type=jnp.float32) + b2_ref[...])
        lhs = (f_ref[0].astype(jnp.float32) * g).astype(jnp.bfloat16)   # gate rows
    else:
        lhs = f_ref[0]

    y = jnp.dot(lhs, wc_ref[...], preferred_element_type=jnp.float32) + cb_ref[...]

    if has_proj:
        sk = jnp.dot(skip_ref[0], pw_ref[...],
                     preferred_element_type=jnp.float32) + pb_ref[...]
    else:
        sk = skip_ref[0].astype(jnp.float32)

    o_ref[0] = jnp.maximum(y + sk, 0.0).astype(o_ref.dtype)


def cconv_residual(f, wc, cbias, skip, pooled=None, se=None, proj=None):
    """Fused: SE gating + 1x1 c-conv (folded BN) + (projected) residual + ReLU."""
    B, HW, Wb = f.shape
    Wout = wc.shape[1]
    has_se = se is not None
    has_proj = proj is not None

    HWp = _round_up(HW, 8)
    thw = HWp if HWp <= _TM_TARGET else _TM_TARGET
    HWp = _round_up(HWp, thw)
    if HWp != HW:
        f = jnp.pad(f, ((0, 0), (0, HWp - HW), (0, 0)))
        skip = jnp.pad(skip, ((0, 0), (0, HWp - HW), (0, 0)))
    Cs = skip.shape[-1]

    inputs = [f.astype(jnp.bfloat16)]
    in_specs = [pl.BlockSpec((1, thw, Wb), lambda b, j: (b, j, 0))]
    if has_se:
        w1, b1, w2, b2 = se
        Wse = w1.shape[1]
        inputs += [pooled.astype(jnp.float32),
                   w1.astype(jnp.float32), b1.reshape(1, Wse).astype(jnp.float32),
                   w2.astype(jnp.float32), b2.reshape(1, Wb).astype(jnp.float32)]
        in_specs += [pl.BlockSpec((1, 1, Wb), lambda b, j: (b, 0, 0)),
                     pl.BlockSpec((Wb, Wse), lambda b, j: (0, 0)),
                     pl.BlockSpec((1, Wse), lambda b, j: (0, 0)),
                     pl.BlockSpec((Wse, Wb), lambda b, j: (0, 0)),
                     pl.BlockSpec((1, Wb), lambda b, j: (0, 0))]
    inputs += [wc.astype(jnp.bfloat16), cbias.reshape(1, Wout).astype(jnp.float32),
               skip.astype(jnp.bfloat16)]
    in_specs += [pl.BlockSpec((Wb, Wout), lambda b, j: (0, 0)),
                 pl.BlockSpec((1, Wout), lambda b, j: (0, 0)),
                 pl.BlockSpec((1, thw, Cs), lambda b, j: (b, j, 0))]
    if has_proj:
        pw, pb = proj
        inputs += [pw.astype(jnp.bfloat16), pb.reshape(1, Wout).astype(jnp.float32)]
        in_specs += [pl.BlockSpec((Cs, Wout), lambda b, j: (0, 0)),
                     pl.BlockSpec((1, Wout), lambda b, j: (0, 0))]

    out = pl.pallas_call(
        functools.partial(_cconv_fused_kernel, has_se=has_se, has_proj=has_proj),
        out_shape=jax.ShapeDtypeStruct((B, HWp, Wout), jnp.bfloat16),
        grid=(B, HWp // thw),
        in_specs=in_specs,
        out_specs=pl.BlockSpec((1, thw, Wout), lambda b, j: (b, j, 0)),
        compiler_params=_compiler_params(("parallel", "parallel")),
    )(*inputs)
    return out[:, :HW]


def _head_kernel(x_ref, w_ref, b_ref, o_ref, *, inv_hw):
    pooled = jnp.sum(x_ref[0].astype(jnp.float32), axis=0, keepdims=True) * inv_hw
    o_ref[0] = (jnp.dot(pooled, w_ref[...], preferred_element_type=jnp.float32)
                + b_ref[...])


def head_apply(x, w, b):
    """Global average pool + Linear (bias)."""
    B, H, W, C = x.shape
    nc = w.shape[1]
    out = pl.pallas_call(
        functools.partial(_head_kernel, inv_hw=1.0 / float(H * W)),
        out_shape=jax.ShapeDtypeStruct((B, 1, nc), jnp.float32),
        grid=(B,),
        in_specs=[
            pl.BlockSpec((1, H * W, C), lambda b: (b, 0, 0)),
            pl.BlockSpec((C, nc), lambda b: (0, 0)),
            pl.BlockSpec((1, nc), lambda b: (0, 0)),
        ],
        out_specs=pl.BlockSpec((1, 1, nc), lambda b: (b, 0, 0)),
        compiler_params=_compiler_params(("parallel",)),
    )(x.reshape(B, H * W, C).astype(jnp.bfloat16),
      w.astype(jnp.float32), b.reshape(1, nc).astype(jnp.float32))
    return out.reshape(B, nc)


# ------------------------------- JAX glue ----------------------------------

def fold_bn(w2d, cout, gamma=None, beta=None, mean=None, var=None):
    """Fold inference BatchNorm into the preceding conv matmul weight + bias."""
    gamma = jnp.ones((cout,), jnp.float32) if gamma is None else gamma
    beta = jnp.zeros((cout,), jnp.float32) if beta is None else beta
    mean = jnp.zeros((cout,), jnp.float32) if mean is None else mean
    var = jnp.ones((cout,), jnp.float32) if var is None else var
    scale = gamma / jnp.sqrt(var + BN_EPS)
    return w2d * scale[None, :], beta - mean * scale


def im2col(x, k, stride, pad):
    """x: (B,H,W,C) -> patches (B,Ho,Wo, k*k*C) ordered (di, dj, c)."""
    # TODO(synk): at production resolutions do the window extraction in-kernel
    # from a VMEM-resident halo tile instead of materializing 9x patches in HBM.
    B, H, W, C = x.shape
    xp = jnp.pad(x, ((0, 0), (pad, pad), (pad, pad), (0, 0)))
    Ho = (H + 2 * pad - k) // stride + 1
    Wo = (W + 2 * pad - k) // stride + 1
    cols = []
    for di in range(k):
        for dj in range(k):
            cols.append(xp[:, di:di + stride * Ho:stride, dj:dj + stride * Wo:stride, :])
    return jnp.concatenate(cols, axis=-1), Ho, Wo


def res_bottleneck_block(x, blk):
    """ResBottleneckBlock: relu( skip + BottleneckTransform(x) )."""
    B, H, W, Cin = x.shape
    stride = blk["stride"]
    Wb = blk["a_w"].shape[1]
    Wout = blk["c_w"].shape[1]

    # a: 1x1 conv (+folded BN) + ReLU
    a = matmul_bias_act(x.reshape(B * H * W, Cin), blk["a_w"], blk["a_b"], act="relu")
    a = a.reshape(B, H, W, Wb)

    # b: grouped 3x3 conv (single kernel, block-diagonal dense weight) + BN + ReLU,
    #    with the SE global average pool fused into the same kernel.
    patches, Ho, Wo = im2col(a, 3, stride, 1)
    patches = patches.reshape(B, Ho * Wo, 9 * Wb)
    if blk["se"] is not None:
        f, pooled = conv_matmul_relu_pool(patches, blk["b_w"], blk["b_b"])
    else:
        f = matmul_bias_act(patches.reshape(B * Ho * Wo, 9 * Wb), blk["b_w"],
                            blk["b_b"], act="relu").reshape(B, Ho * Wo, Wb)
        pooled = None

    # Skip path (projection is fused into the c-conv kernel below).
    if blk["proj_w"] is not None:
        xs = x if stride == 1 else x[:, ::stride, ::stride, :]
        # TODO(synk): the stride-2 subsample of the skip input is still a wrapper-side
        # slice; it could be expressed via the kernel's index_map instead.
        skip = xs.reshape(B, Ho * Wo, Cin)
        proj = (blk["proj_w"], blk["proj_b"])
    else:
        skip = x.reshape(B, Ho * Wo, Cin)      # identity skip: Cin == Wout, stride == 1
        proj = None

    # c: SE gating + 1x1 conv (+folded BN) + (projected) residual + ReLU, all fused.
    out = cconv_residual(f, blk["c_w"], blk["c_b"], skip, pooled=pooled,
                         se=blk["se"], proj=proj)
    return out.reshape(B, Ho, Wo, Wout)


def anynet_forward(x_nchw, params, cfg):
    x = jnp.transpose(x_nchw, (0, 2, 3, 1)).astype(jnp.bfloat16)   # NCHW -> NHWC
    B = x.shape[0]
    # Stem: 3x3 / stride 2 / pad 1 conv + BN + ReLU
    patches, Ho, Wo = im2col(x, 3, 2, 1)
    y = matmul_bias_act(patches.reshape(B * Ho * Wo, 27), params["stem_w"],
                        params["stem_b"], act="relu")
    x = y.reshape(B, Ho, Wo, cfg["stem_w"])
    # Stages of ResBottleneckBlocks
    for stage in params["stages"]:
        for blk in stage:
            x = res_bottleneck_block(x, blk)
    # Head: global avg pool + FC
    return head_apply(x, params["fc_w"], params["fc_b"])


# --------------------------- parameter creation -----------------------------

def init_anynet_params(key, cfg):
    keys = iter(jax.random.split(key, 256))

    def nxt():
        return next(keys)

    def conv_w(kh, kw, cin, cout):
        std = math.sqrt(2.0 / (kh * kw * cout))   # matches weight.normal_(0, sqrt(2/fan_out))
        return std * jax.random.normal(nxt(), (kh, kw, cin, cout), jnp.float32)

    def conv_bn(kh, kw, cin, cout):
        w, b = fold_bn(conv_w(kh, kw, cin, cout).reshape(kh * kw * cin, cout), cout)
        return w.astype(jnp.bfloat16), b

    def grouped_conv_bn(cin, cout, groups):
        # Grouped 3x3 conv expressed as one dense (9*cin, cout) matmul weight that is
        # block-diagonal across groups (zeros elsewhere); column order matches im2col.
        # TODO(synk): for configs with many groups, use a group grid axis instead.
        cpg, opg = cin // groups, cout // groups
        std = math.sqrt(2.0 / (9 * cout))
        wg = std * jax.random.normal(nxt(), (3, 3, groups, cpg, opg), jnp.float32)
        w = jnp.zeros((3, 3, cin, cout), jnp.float32)
        for g in range(groups):
            w = w.at[:, :, g * cpg:(g + 1) * cpg, g * opg:(g + 1) * opg].set(wg[:, :, g])
        w, b = fold_bn(w.reshape(9 * cin, cout), cout)
        return w.astype(jnp.bfloat16), b

    params = {}
    params["stem_w"], params["stem_b"] = conv_bn(3, 3, 3, cfg["stem_w"])

    stages = []
    prev_w = cfg["stem_w"]
    se_r = cfg["se_r"]
    for d, w, s, bm, gw in zip(cfg["ds"], cfg["ws"], cfg["ss"], cfg["bms"], cfg["gws"]):
        blocks = []
        for i in range(d):
            b_stride = s if i == 0 else 1
            b_w_in = prev_w if i == 0 else w
            w_b = int(round(w * bm))
            groups = w_b // gw
            blk = {"stride": b_stride}
            blk["a_w"], blk["a_b"] = conv_bn(1, 1, b_w_in, w_b)
            blk["b_w"], blk["b_b"] = grouped_conv_bn(w_b, w_b, groups)
            if se_r:
                w_se = int(round(b_w_in * se_r))
                # TODO(synk): PyTorch leaves SE conv biases at nn.Conv2d default init;
                # zeros are used here.
                blk["se"] = (conv_w(1, 1, w_b, w_se).reshape(w_b, w_se),
                             jnp.zeros((w_se,), jnp.float32),
                             conv_w(1, 1, w_se, w_b).reshape(w_se, w_b),
                             jnp.zeros((w_b,), jnp.float32))
            else:
                blk["se"] = None
            blk["c_w"], blk["c_b"] = conv_bn(1, 1, w_b, w)
            if b_w_in != w or b_stride != 1:
                blk["proj_w"], blk["proj_b"] = conv_bn(1, 1, b_w_in, w)
            else:
                blk["proj_w"], blk["proj_b"] = None, None
            blocks.append(blk)
        stages.append(blocks)
        prev_w = w
    params["stages"] = stages
    params["fc_w"] = (1.0 / float(prev_w)) * jax.random.normal(
        nxt(), (prev_w, cfg["nc"]), jnp.float32)
    params["fc_b"] = jnp.zeros((cfg["nc"],), jnp.float32)
    return params


# --------------------------------- main -------------------------------------

if __name__ == "__main__":
    cfg = dict(stem_w=8, ds=[1, 2], ws=[8, 16], ss=[1, 2],
               bms=[1.0, 1.0], gws=[4, 8], se_r=0.25, nc=10)
    key = jax.random.PRNGKey(0)
    kp, kx = jax.random.split(key)
    params = init_anynet_params(kp, cfg)
    x = jax.random.normal(kx, (2, 3, 16, 16), jnp.float32)   # NCHW, like PyTorch
    out = anynet_forward(x, params, cfg)
    out = jax.block_until_ready(out)
    assert out.shape == (2, cfg["nc"]), out.shape
    assert bool(jnp.all(jnp.isfinite(out)))
    print("KERNEL_OK")
</pallas_src>

<mosaic_0001>
module attributes {stable_mosaic.version = 11 : i64} {
  func.func @_mm_bias_act_kernel(%arg0: i32, %arg1: memref<128x27xbf16, #tpu.memory_space<vmem>>, %arg2: memref<27x8xbf16, #tpu.memory_space<vmem>>, %arg3: memref<1x8xf32, #tpu.memory_space<vmem>>, %arg4: memref<128x8xbf16, #tpu.memory_space<vmem>>) attributes {dimension_semantics = [#tpu.dimension_semantics<parallel>], iteration_bounds = array<i64: 1>, scalar_prefetch = 0 : i64, scratch_operands = 0 : i64, tpu.core_type = #tpu.core_type<tc>, window_params = [{transform_indices = @transform_0, window_bounds = array<i64: 128, 27>}, {pipeline_mode = #tpu.pipeline_mode<synchronous>, transform_indices = @transform_1, window_bounds = array<i64: 27, 8>}, {pipeline_mode = #tpu.pipeline_mode<synchronous>, transform_indices = @transform_2, window_bounds = array<i64: 1, 8>}, {transform_indices = @transform_3, window_bounds = array<i64: 128, 8>}]} {
    %c0 = arith.constant 0 : index
    %c0_0 = arith.constant 0 : index
    %0 = vector.load %arg1[%c0, %c0_0] : memref<128x27xbf16, #tpu.memory_space<vmem>>, vector<128x27xbf16>
    %c0_1 = arith.constant 0 : index
    %c0_2 = arith.constant 0 : index
    %1 = vector.load %arg2[%c0_1, %c0_2] : memref<27x8xbf16, #tpu.memory_space<vmem>>, vector<27x8xbf16>
    %cst = arith.constant dense<0.000000e+00> : vector<128x8xf32>
    %2 = tpu.matmul %0, %1, %cst {dimension_numbers = #tpu.dot_dimension_numbers<[1], [0], [0], [1], [0, 0, 1, 1], [], []>} : vector<128x27xbf16>, vector<27x8xbf16>, vector<128x8xf32> -> vector<128x8xf32>
    %c0_3 = arith.constant 0 : index
    %c0_4 = arith.constant 0 : index
    %3 = vector.load %arg3[%c0_3, %c0_4] : memref<1x8xf32, #tpu.memory_space<vmem>>, vector<1x8xf32>
    %4 = vector.broadcast %3 : vector<1x8xf32> to vector<128x8xf32>
    %5 = arith.addf %2, %4 : vector<128x8xf32>
    %cst_5 = arith.constant 0.000000e+00 : f32
    %6 = vector.broadcast %cst_5 : f32 to vector<128x8xf32>
    %7 = arith.maximumf %5, %6 : vector<128x8xf32>
    %8 = arith.truncf %7 : vector<128x8xf32> to vector<128x8xbf16>
    %c0_6 = arith.constant 0 : index
    %c0_7 = arith.constant 0 : index
    %9 = vector.load %arg4[%c0_6, %c0_7] : memref<128x8xbf16, #tpu.memory_space<vmem>>, vector<128x8xbf16>
    tpu.vector_store %arg4[%c0_6, %c0_7], %8 {strides = array<i32>} : memref<128x8xbf16, #tpu.memory_space<vmem>>, vector<128x8xbf16>,
    return
  }
  func.func @transform_0(%arg0: i32) -> (i32, i32) {
    %c0_i32 = arith.constant 0 : i32
    %c0_i32_0 = arith.constant 0 : i32
    return %arg0, %c0_i32 : i32, i32
  }
  func.func @transform_1(%arg0: i32) -> (i32, i32) {
    %c0_i32 = arith.constant 0 : i32
    %c0_i32_0 = arith.constant 0 : i32
    %c0_i32_1 = arith.constant 0 : i32
    return %c0_i32, %c0_i32_0 : i32, i32
  }
  func.func @transform_2(%arg0: i32) -> (i32, i32) {
    %c0_i32 = arith.constant 0 : i32
    %c0_i32_0 = arith.constant 0 : i32
    %c0_i32_1 = arith.constant 0 : i32
    return %c0_i32, %c0_i32_0 : i32, i32
  }
  func.func @transform_3(%arg0: i32) -> (i32, i32) {
    %c0_i32 = arith.constant 0 : i32
    %c0_i32_0 = arith.constant 0 : i32
    return %arg0, %c0_i32 : i32, i32
  }
}

</mosaic_0001>

<llo_original>
// kernel: tpu_custom_call.1
$region0: #{tpu_custom_call.1}
  #allocation0 [shape = 'u32[]', space=smem, size = 0x4, offset = 0x4, fixed_abs, tag = 'smem constant byte address 0x4 - core index']
  #allocation1 [shape = 'u32[144,128]{1,0:T(1,128)}', space=vmem, size = 0x12000, scoped, tag = 'internal scratch']
  %s0 = inlined_call_operand.vmem [shape: bf16[128,27], index: 0, kind: input, shape index: {}]
  %s1 = inlined_call_operand.vmem [shape: bf16[27,8], index: 1, kind: input, shape index: {}]
  %s2 = inlined_call_operand.vmem [shape: f32[1,8], index: 2, kind: input, shape index: {}]
  %s3 = inlined_call_operand.vmem [shape: bf16[128,8], index: 3, kind: output, shape index: {}]
  %s4 = sld [smem:[#allocation0]]
  $region22: #{tpu_custom_call.1} parent=0
    _
  %s6 = ssub.s32 1, %s4
  %s7 = scalar_select 0, %s6, %s4
  // Predicated region
  $region2: #{tpu_custom_call.1} parent=0 // pred_check
    _
  $region3: #{tpu_custom_call.1} parent=0 // pred_check_branch
    %9 = sbr.rel (0) target = $region5
  $region4: #{tpu_custom_call.1} parent=0 // pred_region
    _
  $region5: #{tpu_custom_call.1} parent=0 // pred_fallthru
    _
  // Predicated region
  $region6: #{tpu_custom_call.1} parent=0 // pred_check
    _
  $region7: #{tpu_custom_call.1} parent=0 // pred_check_branch
    %11 = sbr.rel (0) target = $region9
  $region8: #{tpu_custom_call.1} parent=0 // pred_region
    _
  $region9: #{tpu_custom_call.1} parent=0 // pred_fallthru
    _
  // Predicated region
  $region10: #{tpu_custom_call.1} parent=0 // pred_check
    _
  $region11: #{tpu_custom_call.1} parent=0 // pred_check_branch
    %13 = sbr.rel (0) target = $region13
  $region12: #{tpu_custom_call.1} parent=0 // pred_region
    _
  $region13: #{tpu_custom_call.1} parent=0 // pred_fallthru
    _
  %v15 = vld [vmem:[%s0] sm:$0xf]
  %v16 = vld [vmem:[%s0 + $0x4] sm:$0xf]
  %v17 = vld [vmem:[%s0 + $0x8] sm:$0xf]
  %v18 = vld [vmem:[%s0 + $0xc] sm:$0xf]
  %v19 = vld [vmem:[%s0 + $0x10] sm:$0xf]
  %v20 = vld [vmem:[%s0 + $0x14] sm:$0xf]
  %v21 = vld [vmem:[%s0 + $0x18] sm:$0xf]
  %v22 = vld [vmem:[%s0 + $0x1c] sm:$0xf]
  %v23 = vld [vmem:[%s0 + $0x20] sm:$0xf]
  %v24 = vld [vmem:[%s0 + $0x24] sm:$0xf]
  %v25 = vld [vmem:[%s0 + $0x28] sm:$0xf]
  %v26 = vld [vmem:[%s0 + $0x2c] sm:$0xf]
  %v27 = vld [vmem:[%s0 + $0x30] sm:$0xf]
  %v28 = vld [vmem:[%s0 + $0x34] sm:$0xf]
  %v29 = vld [vmem:[%s0 + $0x38] sm:$0xf]
  %v30 = vld [vmem:[%s0 + $0x3c] sm:$0xf]
  %v31 = vld [vmem:[%s1] sm:$0xf]
  %v32 = vld [vmem:[%s1 + $0x4] sm:$0xf]
  %v33 = vld [vmem:[%s1 + $0x8] sm:$0xf]
  %v34 = vld [vmem:[%s1 + $0xc] sm:$0x3]
  %v35 = vld [vmem:[%s2] sm:$0x1]
  %v37 = vlaneseq
  %v38 = vshrl.u32 %v37, 7
  %v39 = vsub.s32 0, %v38
  %v40 = vrot.slane %v35, %v39
  %v58 = vunpack.c.l.b16 %v15
  %v59 = vunpack.c.l.b16 %v16
  %v60 = vunpack.c.l.b16 %v17
  %v61 = vunpack.c.l.b16 %v18
  %v62 = vunpack.c.l.b16 %v19
  %v63 = vunpack.c.l.b16 %v20
  %v64 = vunpack.c.l.b16 %v21
  %v65 = vunpack.c.l.b16 %v22
  %v66 = vunpack.c.l.b16 %v23
  %v67 = vunpack.c.l.b16 %v24
  %v68 = vunpack.c.l.b16 %v25
  %v69 = vunpack.c.l.b16 %v26
  %v70 = vunpack.c.l.b16 %v27
  %v71 = vunpack.c.l.b16 %v28
  %v72 = vunpack.c.l.b16 %v29
  %v73 = vunpack.c.l.b16 %v30
  %v74 = vpack.c.b16 %v59, %v58
  %v75 = vpack.c.b16 %v61, %v60
  %v76 = vpack.c.b16 %v63, %v62
  %v77 = vpack.c.b16 %v65, %v64
  %v78 = vpack.c.b16 %v67, %v66
  %v79 = vpack.c.b16 %v69, %v68
  %v80 = vpack.c.b16 %v71, %v70
  %v81 = vpack.c.b16 %v73, %v72
  %v86 = vunpack.c.l.b16 %v31
  %v87 = vunpack.c.l.b16 %v32
  %v88 = vunpack.c.l.b16 %v33
  %v89 = vunpack.c.l.b16 %v34
  %v90 = vpack.c.b16 %v87, %v86
  %v91 = vpack.c.b16 %v89, %v88
  %vm93 = vcmask 220160
  %v95 = vsel %vm93, %v74, 0
  %v98 = vsel %vm93, %v75, 0
  %v101 = vsel %vm93, %v76, 0
  %v104 = vsel %vm93, %v77, 0
  %v107 = vsel %vm93, %v78, 0
  %v110 = vsel %vm93, %v79, 0
  %v113 = vsel %vm93, %v80, 0
  %v116 = vsel %vm93, %v81, 0
  %vm118 = vcmask 1044480
  %vm119 = vcmask 1045504
  %v120 = vsel %vm118, 4294967295, 65535
  %v121 = vsel %vm119, %v120, 0
  %v123 = vand.u32 %v91, %v121
  %125 = vmatprep.subr.bf16.mxu0 0
  %126 = vmatpush1.bf16.msra.mxu0 0
  %127 = vmatprep.subr.bf16.mxu0 0
  %128 = vmatpush1.bf16.msra.mxu0 0
  %129 = vmatprep.subr.bf16.mxu0 0
  %130 = vmatpush1.bf16.msra.mxu0 0
  %131 = vmatprep.subr.bf16.mxu0 0
  %132 = vmatpush1.bf16.msra.mxu0 0
  %133 = vmatprep.subr.bf16.mxu0 0
  %134 = vmatpush1.bf16.msra.mxu0 0
  %135 = vmatprep.subr.bf16.mxu0 0
  %136 = vmatpush1.bf16.msra.mxu0 0
  %137 = vmatprep.subr.bf16.mxu0 0
  %138 = vmatpush1.bf16.msra.mxu0 %v123
  %139 = vmatprep.subr.bf16.mxu0 0
  %140 = vmatpush1.bf16.msra.mxu0 %v90
  %141 = vmatprep.subr.bf16.mxu0 0
  %142 = vmatpush2.bf16.msra.mxu0 0
  %143 = vmatprep.subr.bf16.mxu0 0
  %144 = vmatpush2.bf16.msra.mxu0 0
  %145 = vmatprep.subr.bf16.mxu0 0
  %146 = vmatpush2.bf16.msra.mxu0 0
  %147 = vmatprep.subr.bf16.mxu0 0
  %148 = vmatpush2.bf16.msra.mxu0 0
  %149 = vmatprep.subr.bf16.mxu0 0
  %150 = vmatpush2.bf16.msra.mxu0 0
  %151 = vmatprep.subr.bf16.mxu0 0
  %152 = vmatpush2.bf16.msra.mxu0 0
  %153 = vmatprep.subr.bf16.mxu0 0
  %154 = vmatpush2.bf16.msra.mxu0 0
  %155 = vmatprep.subr.bf16.mxu0 0
  %156 = vmatpush2.bf16.msra.mxu0 0
  %157 = vmatprep.mubr.bf16.mxu0 0
  %158 = vmatmul.mubr.bf16.gmra.mxu0 %v95
  %v159 = vpop.f32.mrf.mxu0
  %v160 = vadd.f32 %v40, %v159
  %v161 = vpop.f32.mrf.mxu0
  %v162 = vpop.f32.mrf.mxu0
  %v163 = vadd.f32 %v40, %v162
  %v164 = vpop.f32.mrf.mxu0
  %165 = vmatprep.mubr.bf16.mxu0 0
  %166 = vmatmul.mubr.bf16.gmra.mxu0 %v98
  %v167 = vpop.f32.mrf.mxu0
  %v168 = vadd.f32 %v40, %v167
  %v169 = vpop.f32.mrf.mxu0
  %v170 = vpop.f32.mrf.mxu0
  %v171 = vadd.f32 %v40, %v170
  %v172 = vpop.f32.mrf.mxu0
  %173 = vmatprep.mubr.bf16.mxu0 0
  %174 = vmatmul.mubr.bf16.gmra.mxu0 %v101
  %v175 = vpop.f32.mrf.mxu0
  %v176 = vadd.f32 %v40, %v175
  %v177 = vpop.f32.mrf.mxu0
  %v178 = vpop.f32.mrf.mxu0
  %v179 = vadd.f32 %v40, %v178
  %v180 = vpop.f32.mrf.mxu0
  %181 = vmatprep.mubr.bf16.mxu0 0
  %182 = vmatmul.mubr.bf16.gmra.mxu0 %v104
  %v183 = vpop.f32.mrf.mxu0
  %v184 = vadd.f32 %v40, %v183
  %v185 = vpop.f32.mrf.mxu0
  %v186 = vpop.f32.mrf.mxu0
  %v187 = vadd.f32 %v40, %v186
  %v188 = vpop.f32.mrf.mxu0
  %189 = vmatprep.mubr.bf16.mxu0 0
  %190 = vmatmul.mubr.bf16.gmra.mxu0 %v107
  %v191 = vpop.f32.mrf.mxu0
  %v192 = vadd.f32 %v40, %v191
  %v193 = vpop.f32.mrf.mxu0
  %v194 = vpop.f32.mrf.mxu0
  %v195 = vadd.f32 %v40, %v194
  %v196 = vpop.f32.mrf.mxu0
  %197 = vmatprep.mubr.bf16.mxu0 0
  %198 = vmatmul.mubr.bf16.gmra.mxu0 %v110
  %v199 = vpop.f32.mrf.mxu0
  %v200 = vadd.f32 %v40, %v199
  %v201 = vpop.f32.mrf.mxu0
  %v202 = vpop.f32.mrf.mxu0
  %v203 = vadd.f32 %v40, %v202
  %v204 = vpop.f32.mrf.mxu0
  %205 = vmatprep.mubr.bf16.mxu0 0
  %206 = vmatmul.mubr.bf16.gmra.mxu0 %v113
  %v207 = vpop.f32.mrf.mxu0
  %v208 = vadd.f32 %v40, %v207
  %v209 = vpop.f32.mrf.mxu0
  %v210 = vpop.f32.mrf.mxu0
  %v211 = vadd.f32 %v40, %v210
  %v212 = vpop.f32.mrf.mxu0
  %213 = vmatprep.mubr.bf16.mxu0 0
  %214 = vmatmul.mubr.bf16.gmra.mxu0 %v116
  %v215 = vpop.f32.mrf.mxu0
  %v216 = vadd.f32 %v40, %v215
  %v217 = vpop.f32.mrf.mxu0
  %v218 = vpop.f32.mrf.mxu0
  %v219 = vadd.f32 %v40, %v218
  %v220 = vpop.f32.mrf.mxu0
  %221 = vdwg.mxu0
  %v222 = vmax.f32 %v160, 0.0
  %v223 = vmax.f32 %v163, 0.0
  %v224 = vmax.f32 %v168, 0.0
  %v225 = vmax.f32 %v171, 0.0
  %v226 = vmax.f32 %v176, 0.0
  %v227 = vmax.f32 %v179, 0.0
  %v228 = vmax.f32 %v184, 0.0
  %v229 = vmax.f32 %v187, 0.0
  %v230 = vmax.f32 %v192, 0.0
  %v231 = vmax.f32 %v195, 0.0
  %v232 = vmax.f32 %v200, 0.0
  %v233 = vmax.f32 %v203, 0.0
  %v234 = vmax.f32 %v208, 0.0
  %v235 = vmax.f32 %v211, 0.0
  %v236 = vmax.f32 %v216, 0.0
  %v237 = vmax.f32 %v219, 0.0
  %v238 = vpack.c.bf16 %v223, %v222
  %v239 = vpack.c.bf16 %v225, %v224
  %v240 = vpack.c.bf16 %v227, %v226
  %v241 = vpack.c.bf16 %v229, %v228
  %v242 = vpack.c.bf16 %v231, %v230
  %v243 = vpack.c.bf16 %v233, %v232
  %v244 = vpack.c.bf16 %v235, %v234
  %v245 = vpack.c.bf16 %v237, %v236
  %v254 = vunpack.c.l.b16 %v238
  %v255 = vunpack.c.h.b16 %v238
  %v256 = vunpack.c.l.b16 %v239
  %v257 = vunpack.c.h.b16 %v239
  %v258 = vunpack.c.l.b16 %v240
  %v259 = vunpack.c.h.b16 %v240
  %v260 = vunpack.c.l.b16 %v241
  %v261 = vunpack.c.h.b16 %v241
  %v262 = vunpack.c.l.b16 %v242
  %v263 = vunpack.c.h.b16 %v242
  %v264 = vunpack.c.l.b16 %v243
  %v265 = vunpack.c.h.b16 %v243
  %v266 = vunpack.c.l.b16 %v244
  %v267 = vunpack.c.h.b16 %v244
  %v268 = vunpack.c.l.b16 %v245
  %v269 = vunpack.c.h.b16 %v245
  %v270 = vpack.c.b16 %v254, %v254
  %v271 = vpack.c.b16 %v255, %v255
  %v272 = vpack.c.b16 %v256, %v256
  %v273 = vpack.c.b16 %v257, %v257
  %v274 = vpack.c.b16 %v258, %v258
  %v275 = vpack.c.b16 %v259, %v259
  %v276 = vpack.c.b16 %v260, %v260
  %v277 = vpack.c.b16 %v261, %v261
  %v278 = vpack.c.b16 %v262, %v262
  %v279 = vpack.c.b16 %v263, %v263
  %v280 = vpack.c.b16 %v264, %v264
  %v281 = vpack.c.b16 %v265, %v265
  %v282 = vpack.c.b16 %v266, %v266
  %v283 = vpack.c.b16 %v267, %v267
  %v284 = vpack.c.b16 %v268, %v268
  %v285 = vpack.c.b16 %v269, %v269
  %vm302 = vcmask 60416
  %303 = vst.msk [vmem:[%s3] sm:$0xf] %vm302, %v270
  %304 = vst.msk [vmem:[%s3 + $0x4] sm:$0xf] %vm302, %v271
  %305 = vst.msk [vmem:[%s3 + $0x8] sm:$0xf] %vm302, %v272
  %306 = vst.msk [vmem:[%s3 + $0xc] sm:$0xf] %vm302, %v273
  %307 = vst.msk [vmem:[%s3 + $0x10] sm:$0xf] %vm302, %v274
  %308 = vst.msk [vmem:[%s3 + $0x14] sm:$0xf] %vm302, %v275
  %309 = vst.msk [vmem:[%s3 + $0x18] sm:$0xf] %vm302, %v276
  %310 = vst.msk [vmem:[%s3 + $0x1c] sm:$0xf] %vm302, %v277
  %311 = vst.msk [vmem:[%s3 + $0x20] sm:$0xf] %vm302, %v278
  %312 = vst.msk [vmem:[%s3 + $0x24] sm:$0xf] %vm302, %v279
  %313 = vst.msk [vmem:[%s3 + $0x28] sm:$0xf] %vm302, %v280
  %314 = vst.msk [vmem:[%s3 + $0x2c] sm:$0xf] %vm302, %v281
  %315 = vst.msk [vmem:[%s3 + $0x30] sm:$0xf] %vm302, %v282
  %316 = vst.msk [vmem:[%s3 + $0x34] sm:$0xf] %vm302, %v283
  %317 = vst.msk [vmem:[%s3 + $0x38] sm:$0xf] %vm302, %v284
  %318 = vst.msk [vmem:[%s3 + $0x3c] sm:$0xf] %vm302, %v285
  // Predicated region
  $region14: #{tpu_custom_call.1} parent=0 // pred_check
    _
  $region15: #{tpu_custom_call.1} parent=0 // pred_check_branch
    %320 = sbr.rel (0) target = $region17
  $region16: #{tpu_custom_call.1} parent=0 // pred_region
    _
  $region17: #{tpu_custom_call.1} parent=0 // pred_fallthru
    _
  // Predicated region
  $region18: #{tpu_custom_call.1} parent=0 // pred_check
    _
  $region19: #{tpu_custom_call.1} parent=0 // pred_check_branch
    %322 = sbr.rel (0) target = $region21
  $region20: #{tpu_custom_call.1} parent=0 // pred_region
    _
  $region21: #{tpu_custom_call.1} parent=0 // pred_fallthru
    _

</llo_original>
